<compile_context>
chip_gen: v6e
topology: v6e:2x2x1
jax: 0.10.0
libtpu: 0.0.40
codegen_flags: <defaults>
</compile_context>

<pallas_src>
import functools

import jax
import jax.numpy as jnp
from jax.experimental import pallas as pl
from jax.experimental.pallas import tpu as pltpu


def _round_up(x: int, m: int) -> int:
    return ((x + m - 1) // m) * m


def _gelu_tanh(x):
    # tanh-approximate GELU.
    # TODO(synk): PyTorch nn.GELU() defaults to the exact erf form; erf has no
    # guaranteed Mosaic lowering, so the tanh approximation (max err ~1e-3) is
    # used here (equivalent to nn.GELU(approximate='tanh')).
    c = 0.7978845608028654  # sqrt(2/pi)
    return 0.5 * x * (1.0 + jnp.tanh(c * (x + 0.044715 * x * x * x)))


def _pick_hidden_chunk(h: int, target: int) -> int:
    """Pick a hidden-dim chunk that is a multiple of 128 and divides H.

    Chunks that divide H exactly avoid garbage columns/rows leaking into the
    accumulated partial products; falling back to the full H keeps correctness
    when H is small or not 128-aligned.
    """
    if h <= target or h % 128 != 0:
        return h
    hk = (target // 128) * 128
    while h % hk != 0:
        hk -= 128
    return hk


def _ffn_kernel(x_ref, w1_ref, b1_ref, w2_ref, b2_ref, o_ref, acc_ref):
    k = pl.program_id(1)

    @pl.when(k == 0)
    def _init():
        acc_ref[...] = jnp.zeros_like(acc_ref)

    w1 = w1_ref[...]
    w2 = w2_ref[...]
    # Cast the streamed x tile to the (possibly bf16) weight dtype so both
    # matmuls hit the native MXU path; accumulation stays f32.
    x = x_ref[...].astype(w1.dtype)
    h = jnp.dot(x, w1, preferred_element_type=jnp.float32)
    h = h + b1_ref[...].astype(jnp.float32)          # (1, HK) broadcast over rows
    h = _gelu_tanh(h)
    acc_ref[...] += jnp.dot(h.astype(w2.dtype), w2,
                            preferred_element_type=jnp.float32)

    @pl.when(k == pl.num_programs(1) - 1)
    def _finalize():
        y = acc_ref[...] + b2_ref[...].astype(jnp.float32)  # (1, D_out) broadcast
        o_ref[...] = y.astype(o_ref.dtype)


def feedforward_forward(x, w1, b1, w2, b2, *, tile_m: int = 512,
                        hidden_chunk: int = 512, use_bf16_matmul: bool = True):
    """x: (..., D_in); w1: (D_in, H); b1: (H,); w2: (H, D_out); b2: (D_out,)."""
    *lead, d_in = x.shape
    d_hidden = w1.shape[1]
    d_out = w2.shape[1]

    # Lane-dense 2D view: rows on sublanes, features on lanes.
    x2 = x.reshape(-1, d_in)
    m = x2.shape[0]

    # Dtype-dependent sublane multiple (f32 -> 8, bf16 -> 16, int8 -> 32).
    x_item = jnp.dtype(x.dtype).itemsize
    sublane = max(8, 32 // max(1, x_item))

    # Row tile: large enough to amortize per-grid-step overhead, but >=2 tiles
    # whenever possible so the "parallel" row axis feeds both v7x TensorCores.
    # No host-side padding: the ragged last block is masked by Pallas.
    n_tiles = max(2, pl.cdiv(m, tile_m))
    tm = min(_round_up(pl.cdiv(m, n_tiles), sublane), _round_up(m, sublane))
    grid_m = pl.cdiv(m, tm)

    # Hidden-dimension chunking (reduction axis, last in grid).
    hk = _pick_hidden_chunk(d_hidden, hidden_chunk)
    grid_k = d_hidden // hk

    # One-time weight cast: bf16 matmul operands halve weight DMA bytes and use
    # the native bf16 MXU on v6e/v7x. Biases stay f32 (added in f32 anyway).
    if use_bf16_matmul and w1.dtype == jnp.float32:
        w1 = w1.astype(jnp.bfloat16)
        w2 = w2.astype(jnp.bfloat16)
    w_item = jnp.dtype(w1.dtype).itemsize

    # VMEM footprint estimate (double-buffered streamed blocks + f32 scratch),
    # used to raise the scoped VMEM limit above the 16/32 MiB defaults.
    est = 2 * (tm * d_in * x_item          # x row tile
               + d_in * hk * w_item        # W1 chunk
               + hk * 4                    # b1 chunk
               + hk * d_out * w_item       # W2 chunk
               + d_out * 4                 # b2
               + tm * d_out * x_item)      # output tile
    est += tm * d_out * 4                  # f32 accumulator scratch
    est += 2 * tm * hk * 4                 # f32 hidden intermediate headroom
    vmem_limit = int(min(128 * 1024 * 1024, max(32 * 1024 * 1024, 2 * est)))

    out2 = pl.pallas_call(
        _ffn_kernel,
        out_shape=jax.ShapeDtypeStruct((m, d_out), x.dtype),
        grid_spec=pltpu.PrefetchScalarGridSpec(
            num_scalar_prefetch=0,
            grid=(grid_m, grid_k),
            in_specs=[
                pl.BlockSpec((tm, d_in), lambda i, k: (i, 0)),    # x rows (resident over k)
                pl.BlockSpec((d_in, hk), lambda i, k: (0, k)),    # W1 chunk
                pl.BlockSpec((1, hk), lambda i, k: (0, k)),       # b1 chunk
                pl.BlockSpec((hk, d_out), lambda i, k: (k, 0)),   # W2 chunk
                pl.BlockSpec((1, d_out), lambda i, k: (0, 0)),    # b2
            ],
            out_specs=pl.BlockSpec((tm, d_out), lambda i, k: (i, 0)),
            scratch_shapes=[pltpu.VMEM((tm, d_out), jnp.float32)],
        ),
        compiler_params=pltpu.CompilerParams(
            dimension_semantics=("parallel", "arbitrary"),
            vmem_limit_bytes=vmem_limit,
        ),
    )(x2, w1, b1.reshape(1, d_hidden), w2, b2.reshape(1, d_out))

    return out2.reshape(*lead, d_out)


def feedforward_ref(x, w1, b1, w2, b2):
    """Plain-JAX f32 reference of the PyTorch forward (same GELU variant)."""
    h = _gelu_tanh(jnp.dot(x, w1) + b1)
    return jnp.dot(h, w2) + b2


if __name__ == "__main__":
    input_dim, hidden_dim, output_dim = 32, 128, 32
    batch, seq = 2, 8

    key = jax.random.PRNGKey(0)
    kx, k1, k2, k3, k4 = jax.random.split(key, 5)

    x = jax.random.normal(kx, (batch, seq, input_dim), dtype=jnp.float32)
    # Parameters of k1convL1 / k1convL2 stored as (in, out) so the kernel
    # computes x @ W, equivalent to PyTorch's x @ W_torch.T.
    w1 = jax.random.normal(k1, (input_dim, hidden_dim), dtype=jnp.float32) * 0.1
    b1 = jax.random.normal(k2, (hidden_dim,), dtype=jnp.float32) * 0.1
    w2 = jax.random.normal(k3, (hidden_dim, output_dim), dtype=jnp.float32) * 0.1
    b2 = jax.random.normal(k4, (output_dim,), dtype=jnp.float32) * 0.1

    out = feedforward_forward(x, w1, b1, w2, b2)
    out = jax.block_until_ready(out)

    ref = feedforward_ref(x, w1, b1, w2, b2)
    assert out.shape == (batch, seq, output_dim)
    # bf16 matmul inputs with f32 accumulation -> small, bounded error.
    assert jnp.allclose(out, ref, atol=3e-2, rtol=3e-2), float(
        jnp.max(jnp.abs(out - ref))
    )

    print("KERNEL_OK")
</pallas_src>

<mosaic_0001>
module attributes {stable_mosaic.version = 11 : i64} {
  func.func @_ffn_kernel(%arg0: i32, %arg1: i32, %arg2: memref<8x32xf32, #tpu.memory_space<vmem>>, %arg3: memref<32x128xbf16, #tpu.memory_space<vmem>>, %arg4: memref<1x128xf32, #tpu.memory_space<vmem>>, %arg5: memref<128x32xbf16, #tpu.memory_space<vmem>>, %arg6: memref<1x32xf32, #tpu.memory_space<vmem>>, %arg7: memref<8x32xf32, #tpu.memory_space<vmem>>, %arg8: memref<8x32xf32, #tpu.memory_space<vmem>>) attributes {dimension_semantics = [#tpu.dimension_semantics<parallel>, #tpu.dimension_semantics<arbitrary>], iteration_bounds = array<i64: 2, 1>, scalar_prefetch = 0 : i64, scratch_operands = 1 : i64, tpu.core_type = #tpu.core_type<tc>, window_params = [{transform_indices = @transform_0, window_bounds = array<i64: 8, 32>}, {transform_indices = @transform_1, window_bounds = array<i64: 32, 128>}, {transform_indices = @transform_2, window_bounds = array<i64: 1, 128>}, {transform_indices = @transform_3, window_bounds = array<i64: 128, 32>}, {pipeline_mode = #tpu.pipeline_mode<synchronous>, transform_indices = @transform_4, window_bounds = array<i64: 1, 32>}, {transform_indices = @transform_5, window_bounds = array<i64: 8, 32>}]} {
    %c0_i32 = arith.constant 0 : i32
    %0 = arith.cmpi eq, %arg1, %c0_i32 : i32
    %1 = arith.extui %0 : i1 to i32
    %c0_i32_0 = arith.constant 0 : i32
    %2 = arith.cmpi ne, %1, %c0_i32_0 : i32
    scf.if %2 {
      %cst_19 = arith.constant 0.000000e+00 : f32
      %32 = vector.broadcast %cst_19 : f32 to vector<8x32xf32>
      %c0_20 = arith.constant 0 : index
      %c0_21 = arith.constant 0 : index
      %33 = vector.load %arg8[%c0_20, %c0_21] : memref<8x32xf32, #tpu.memory_space<vmem>>, vector<8x32xf32>
      tpu.vector_store %arg8[%c0_20, %c0_21], %32 {strides = array<i32>} : memref<8x32xf32, #tpu.memory_space<vmem>>, vector<8x32xf32>,
    } else {
    }
    %c0 = arith.constant 0 : index
    %c0_1 = arith.constant 0 : index
    %3 = vector.load %arg3[%c0, %c0_1] : memref<32x128xbf16, #tpu.memory_space<vmem>>, vector<32x128xbf16>
    %c0_2 = arith.constant 0 : index
    %c0_3 = arith.constant 0 : index
    %4 = vector.load %arg5[%c0_2, %c0_3] : memref<128x32xbf16, #tpu.memory_space<vmem>>, vector<128x32xbf16>
    %c0_4 = arith.constant 0 : index
    %c0_5 = arith.constant 0 : index
    %5 = vector.load %arg2[%c0_4, %c0_5] : memref<8x32xf32, #tpu.memory_space<vmem>>, vector<8x32xf32>
    %6 = arith.truncf %5 : vector<8x32xf32> to vector<8x32xbf16>
    %cst = arith.constant dense<0.000000e+00> : vector<8x128xf32>
    %7 = tpu.matmul %6, %3, %cst {dimension_numbers = #tpu.dot_dimension_numbers<[1], [0], [0], [1], [0, 0, 1, 1], [], []>} : vector<8x32xbf16>, vector<32x128xbf16>, vector<8x128xf32> -> vector<8x128xf32>
    %c0_6 = arith.constant 0 : index
    %c0_7 = arith.constant 0 : index
    %8 = vector.load %arg4[%c0_6, %c0_7] : memref<1x128xf32, #tpu.memory_space<vmem>>, vector<1x128xf32>
    %9 = vector.broadcast %8 : vector<1x128xf32> to vector<8x128xf32>
    %10 = arith.addf %7, %9 : vector<8x128xf32>
    %cst_8 = arith.constant 5.000000e-01 : f32
    %11 = vector.broadcast %cst_8 : f32 to vector<8x128xf32>
    %12 = arith.mulf %11, %10 : vector<8x128xf32>
    %cst_9 = arith.constant 4.471500e-02 : f32
    %13 = vector.broadcast %cst_9 : f32 to vector<8x128xf32>
    %14 = arith.mulf %13, %10 : vector<8x128xf32>
    %15 = arith.mulf %14, %10 : vector<8x128xf32>
    %16 = arith.mulf %15, %10 : vector<8x128xf32>
    %17 = arith.addf %10, %16 : vector<8x128xf32>
    %cst_10 = arith.constant 0.797884583 : f32
    %18 = vector.broadcast %cst_10 : f32 to vector<8x128xf32>
    %19 = arith.mulf %18, %17 : vector<8x128xf32>
    %20 = math.tanh %19 : vector<8x128xf32>
    %cst_11 = arith.constant 1.000000e+00 : f32
    %21 = vector.broadcast %cst_11 : f32 to vector<8x128xf32>
    %22 = arith.addf %21, %20 : vector<8x128xf32>
    %23 = arith.mulf %12, %22 : vector<8x128xf32>
    %c0_12 = arith.constant 0 : index
    %c0_13 = arith.constant 0 : index
    %24 = vector.load %arg8[%c0_12, %c0_13] : memref<8x32xf32, #tpu.memory_space<vmem>>, vector<8x32xf32>
    %25 = arith.truncf %23 : vector<8x128xf32> to vector<8x128xbf16>
    %cst_14 = arith.constant dense<0.000000e+00> : vector<8x32xf32>
    %26 = tpu.matmul %25, %4, %cst_14 {dimension_numbers = #tpu.dot_dimension_numbers<[1], [0], [0], [1], [0, 0, 1, 1], [], []>} : vector<8x128xbf16>, vector<128x32xbf16>, vector<8x32xf32> -> vector<8x32xf32>
    %27 = arith.addf %24, %26 : vector<8x32xf32>
    %c0_15 = arith.constant 0 : index
    %c0_16 = arith.constant 0 : index
    %28 = vector.load %arg8[%c0_15, %c0_16] : memref<8x32xf32, #tpu.memory_space<vmem>>, vector<8x32xf32>
    tpu.vector_store %arg8[%c0_15, %c0_16], %27 {strides = array<i32>} : memref<8x32xf32, #tpu.memory_space<vmem>>, vector<8x32xf32>,
    %c0_i32_17 = arith.constant 0 : i32
    %29 = arith.cmpi eq, %arg1, %c0_i32_17 : i32
    %30 = arith.extui %29 : i1 to i32
    %c0_i32_18 = arith.constant 0 : i32
    %31 = arith.cmpi ne, %30, %c0_i32_18 : i32
    scf.if %31 {
      %c0_19 = arith.constant 0 : index
      %c0_20 = arith.constant 0 : index
      %32 = vector.load %arg8[%c0_19, %c0_20] : memref<8x32xf32, #tpu.memory_space<vmem>>, vector<8x32xf32>
      %c0_21 = arith.constant 0 : index
      %c0_22 = arith.constant 0 : index
      %33 = vector.load %arg6[%c0_21, %c0_22] : memref<1x32xf32, #tpu.memory_space<vmem>>, vector<1x32xf32>
      %34 = vector.broadcast %33 : vector<1x32xf32> to vector<8x32xf32>
      %35 = arith.addf %32, %34 : vector<8x32xf32>
      %c0_23 = arith.constant 0 : index
      %c0_24 = arith.constant 0 : index
      %36 = vector.load %arg7[%c0_23, %c0_24] : memref<8x32xf32, #tpu.memory_space<vmem>>, vector<8x32xf32>
      tpu.vector_store %arg7[%c0_23, %c0_24], %35 {strides = array<i32>} : memref<8x32xf32, #tpu.memory_space<vmem>>, vector<8x32xf32>,
    } else {
    }
    return
  }
  func.func @transform_0(%arg0: i32, %arg1: i32) -> (i32, i32) {
    %c0_i32 = arith.constant 0 : i32
    %c0_i32_0 = arith.constant 0 : i32
    return %arg0, %c0_i32 : i32, i32
  }
  func.func @transform_1(%arg0: i32, %arg1: i32) -> (i32, i32) {
    %c0_i32 = arith.constant 0 : i32
    %c0_i32_0 = arith.constant 0 : i32
    return %c0_i32, %arg1 : i32, i32
  }
  func.func @transform_2(%arg0: i32, %arg1: i32) -> (i32, i32) {
    %c0_i32 = arith.constant 0 : i32
    %c0_i32_0 = arith.constant 0 : i32
    return %c0_i32, %arg1 : i32, i32
  }
  func.func @transform_3(%arg0: i32, %arg1: i32) -> (i32, i32) {
    %c0_i32 = arith.constant 0 : i32
    %c0_i32_0 = arith.constant 0 : i32
    return %arg1, %c0_i32 : i32, i32
  }
  func.func @transform_4(%arg0: i32, %arg1: i32) -> (i32, i32) {
    %c0_i32 = arith.constant 0 : i32
    %c0_i32_0 = arith.constant 0 : i32
    %c0_i32_1 = arith.constant 0 : i32
    return %c0_i32, %c0_i32_0 : i32, i32
  }
  func.func @transform_5(%arg0: i32, %arg1: i32) -> (i32, i32) {
    %c0_i32 = arith.constant 0 : i32
    %c0_i32_0 = arith.constant 0 : i32
    return %arg0, %c0_i32 : i32, i32
  }
}

</mosaic_0001>

<llo_original>
// kernel: tpu_custom_call.1
$region0: #{tpu_custom_call.1}
  #allocation0 [shape = 'u32[]', space=smem, size = 0x4, offset = 0x4, fixed_abs, tag = 'smem constant byte address 0x4 - core index']
  #allocation1 [shape = 'u32[144,128]{1,0:T(1,128)}', space=vmem, size = 0x12000, scoped, tag = 'internal scratch']
  #allocation2 [shape = 'f32[8,32]{1,0:T(8,128)}', space=vmem, size = 0x1000, scoped, tag = 'scratch operand']
  %s0 = inlined_call_operand.vmem [shape: f32[16,32], index: 0, kind: input, shape index: {}]
  %s1 = inlined_call_operand.vmem [shape: bf16[32,128], index: 1, kind: input, shape index: {}]
  %s2 = inlined_call_operand.vmem [shape: f32[1,128], index: 2, kind: input, shape index: {}]
  %s3 = inlined_call_operand.vmem [shape: bf16[128,32], index: 3, kind: input, shape index: {}]
  %s4 = inlined_call_operand.vmem [shape: f32[1,32], index: 4, kind: input, shape index: {}]
  %s5 = inlined_call_operand.hbm [shape: f32[16,32], index: 5, kind: output, shape index: {}]
  %s6 = sld [smem:[#allocation0]]
  $region61: #{tpu_custom_call.1} parent=0
    _
  %s8 = ssub.s32 1, %s6
  %s9 = scalar_select 0, %s8, %s6
  $region1: #{tpu_custom_call.1} parent=0
    #allocation3 [shape = 'u8[8192]{0}', space=vmem, size = 0x2000, scoped, tag = 'output window, operand 0']
    #allocation4 [shape = 's32[2]{0}', space=sflag, size = 0x8, scoped, tag = 'scoped memory for tpu_custom_call.1']
    %10 = vsyncpa [#allocation4], 0
    %s11 = scalar_lea.sflag [#allocation4], 1
    %12 = vsyncpa %s11, 0
    loop: start=0, step=1, limit=4
    $region2: #{tpu_custom_call.1} parent=1 // loop_pre_header
      _
    $region3: #{tpu_custom_call.1} parent=1 // loop_header
      %s14 = sphi 0, %s18
      %p15 = scmp.ge.s32.totalorder %s14, 4
      %s21 = sphi 0, %s33
      %s22 = sphi 0, %s29
      %s23 = sphi 0, %s21
      %s24 = sphi 0, %s22
      %s25 = sphi 0, %s23
      %s26 = sphi 0, %s24
      %s36 = sphi 0, %s38
      %s39 = sphi 0, %s36
      %s40 = sphi 0, %s39
      %s56 = sphi 0, %s40
      %s62 = sphi 0, %s64
      %s65 = sphi 0, %s62
      %s66 = sphi 0, %s65
      %s82 = sphi 0, %s66
      %s88 = sphi 0, %s90
      %s91 = sphi 0, %s88
      %s92 = sphi 0, %s91
      %s108 = sphi 0, %s92
      %s114 = sphi 0, %s116
      %s117 = sphi 0, %s114
      %s118 = sphi 0, %s117
      %s134 = sphi 0, %s118
      %s138 = sphi 0, %s138
      %s140 = sphi 0, %s138
      %s141 = sphi 0, %s140
      %s155 = sphi 0, %s141
      %s161 = sphi 0, %s163
      %s164 = sphi 0, %s161
      %s165 = sphi 0, %s164
      %s181 = sphi 0, %s165
    $region4: #{tpu_custom_call.1} parent=1 // loop_header_branch
      %17 = sbr.rel (%p15) target = $region8
    $region5: #{tpu_custom_call.1} parent=1 // loop_body
      %s19 = ssub.s32 %s14, 1
      %s20 = ssub.s32 %s14, 2
      %s27 = sadd.s32 1, %s22
      %p28 = scmp.ge.s32.totalorder %s27, 1
      %s29 = scalar_select %p28, 0, %s27
      %s30 = sadd.s32 1, %s21
      %s31 = scalar_select %p28, %s30, %s21
      %p32 = scmp.ge.s32.totalorder %s31, 2
      %s33 = scalar_select %p32, 0, %s31
      %s34 = ssub.s32 %s21, %s33
      %p35 = scmp.eq.s32.totalorder %s34, 0
      %s37 = sadd.s32 %s36, 1
      %s38 = scalar_select %p35, %s36, %s37
      %p41 = pneg %p35
      %p42 = scmp.eq.s32.totalorder %s14, 1
      %p43 = por %p41, %p42
      %p44 = scmp.ne.s32.totalorder %s36, %s39
      %p45 = scmp.eq.s32.totalorder %s14, 0
      %p46 = por %p44, %p45
      %p47 = scmp.ne.s32.totalorder %s36, %s39
      %p48 = scmp.eq.s32.totalorder %s19, 1
      %p49 = por %p47, %p48
      %p50 = scmp.ne.s32.totalorder %s39, %s40
      %p51 = scmp.eq.s32.totalorder %s19, 0
      %p52 = por %p50, %p51
      %p53 = scmp.ne.s32.totalorder %s39, %s40
      %p54 = scmp.eq.s32.totalorder %s20, 1
      %p55 = por %p53, %p54
      %p57 = scmp.ne.s32.totalorder %s40, %s56
      %p58 = scmp.eq.s32.totalorder %s20, 0
      %p59 = por %p57, %p58
      %s60 = ssub.s32 %s22, %s29
      %p61 = scmp.eq.s32.totalorder %s60, 0
      %s63 = sadd.s32 %s62, 1
      %s64 = scalar_select %p61, %s62, %s63
      %p67 = pneg %p61
      %p68 = scmp.eq.s32.totalorder %s14, 1
      %p69 = por %p67, %p68
      %p70 = scmp.ne.s32.totalorder %s62, %s65
      %p71 = scmp.eq.s32.totalorder %s14, 0
      %p72 = por %p70, %p71
      %p73 = scmp.ne.s32.totalorder %s62, %s65
      %p74 = scmp.eq.s32.totalorder %s19, 1
      %p75 = por %p73, %p74
      %p76 = scmp.ne.s32.totalorder %s65, %s66
      %p77 = scmp.eq.s32.totalorder %s19, 0
      %p78 = por %p76, %p77
      %p79 = scmp.ne.s32.totalorder %s65, %s66
      %p80 = scmp.eq.s32.totalorder %s20, 1
      %p81 = por %p79, %p80
      %p83 = scmp.ne.s32.totalorder %s66, %s82
      %p84 = scmp.eq.s32.totalorder %s20, 0
      %p85 = por %p83, %p84
      %s86 = ssub.s32 %s22, %s29
      %p87 = scmp.eq.s32.totalorder %s86, 0
      %s89 = sadd.s32 %s88, 1
      %s90 = scalar_select %p87, %s88, %s89
      %p93 = pneg %p87
      %p94 = scmp.eq.s32.totalorder %s14, 1
      %p95 = por %p93, %p94
      %p96 = scmp.ne.s32.totalorder %s88, %s91
      %p97 = scmp.eq.s32.totalorder %s14, 0
      %p98 = por %p96, %p97
      %p99 = scmp.ne.s32.totalorder %s88, %s91
      %p100 = scmp.eq.s32.totalorder %s19, 1
      %p101 = por %p99, %p100
      %p102 = scmp.ne.s32.totalorder %s91, %s92
      %p103 = scmp.eq.s32.totalorder %s19, 0
      %p104 = por %p102, %p103
      %p105 = scmp.ne.s32.totalorder %s91, %s92
      %p106 = scmp.eq.s32.totalorder %s20, 1
      %p107 = por %p105, %p106
      %p109 = scmp.ne.s32.totalorder %s92, %s108
      %p110 = scmp.eq.s32.totalorder %s20, 0
      %p111 = por %p109, %p110
      %s112 = ssub.s32 %s22, %s29
      %p113 = scmp.eq.s32.totalorder %s112, 0
      %s115 = sadd.s32 %s114, 1
      %s116 = scalar_select %p113, %s114, %s115
      %p119 = pneg %p113
      %p120 = scmp.eq.s32.totalorder %s14, 1
      %p121 = por %p119, %p120
      %p122 = scmp.ne.s32.totalorder %s114, %s117
      %p123 = scmp.eq.s32.totalorder %s14, 0
      %p124 = por %p122, %p123
      %p125 = scmp.ne.s32.totalorder %s114, %s117
      %p126 = scmp.eq.s32.totalorder %s19, 1
      %p127 = por %p125, %p126
      %p128 = scmp.ne.s32.totalorder %s117, %s118
      %p129 = scmp.eq.s32.totalorder %s19, 0
      %p130 = por %p128, %p129
      %p131 = scmp.ne.s32.totalorder %s117, %s118
      %p132 = scmp.eq.s32.totalorder %s20, 1
      %p133 = por %p131, %p132
      %p135 = scmp.ne.s32.totalorder %s118, %s134
      %p136 = scmp.eq.s32.totalorder %s20, 0
      %p137 = por %p135, %p136
      %s139 = sadd.s32 %s138, 1
      %p142 = scmp.eq.s32.totalorder %s14, 1
      %p143 = scmp.ne.s32.totalorder %s138, %s140
      %p144 = scmp.eq.s32.totalorder %s14, 0
      %p145 = por %p143, %p144
      %p146 = scmp.ne.s32.totalorder %s138, %s140
      %p147 = scmp.eq.s32.totalorder %s19, 1
      %p148 = por %p146, %p147
      %p149 = scmp.ne.s32.totalorder %s140, %s141
      %p150 = scmp.eq.s32.totalorder %s19, 0
      %p151 = por %p149, %p150
      %p152 = scmp.ne.s32.totalorder %s140, %s141
      %p153 = scmp.eq.s32.totalorder %s20, 1
      %p154 = por %p152, %p153
      %p156 = scmp.ne.s32.totalorder %s141, %s155
      %p157 = scmp.eq.s32.totalorder %s20, 0
      %p158 = por %p156, %p157
      %s159 = ssub.s32 %s21, %s33
      %p160 = scmp.eq.s32.totalorder %s159, 0
      %s162 = sadd.s32 %s161, 1
      %s163 = scalar_select %p160, %s161, %s162
      %p166 = pneg %p160
      %p167 = scmp.eq.s32.totalorder %s14, 1
      %p168 = por %p166, %p167
      %p169 = scmp.ne.s32.totalorder %s161, %s164
      %p170 = scmp.eq.s32.totalorder %s14, 0
      %p171 = por %p169, %p170
      %p172 = scmp.ne.s32.totalorder %s161, %s164
      %p173 = scmp.eq.s32.totalorder %s19, 1
      %p174 = por %p172, %p173
      %p175 = scmp.ne.s32.totalorder %s164, %s165
      %p176 = scmp.eq.s32.totalorder %s19, 0
      %p177 = por %p175, %p176
      %p178 = scmp.ne.s32.totalorder %s164, %s165
      %p179 = scmp.eq.s32.totalorder %s20, 1
      %p180 = por %p178, %p179
      %p182 = scmp.ne.s32.totalorder %s165, %s181
      %p183 = scmp.eq.s32.totalorder %s20, 0
      %p184 = por %p182, %p183
      %p185 = scmp.le.s32.totalorder 1, %s14
      %p186 = scmp.lt.s32.totalorder %s14, 3
      %p187 = pnand %p185, %p186
      %p188 = pneg %p187
      // Predicated region
      $region9: #{tpu_custom_call.1} parent=5 // pred_check
        _
      $region10: #{tpu_custom_call.1} parent=5 // pred_check_branch
        %190 = sbr.rel (%p187) target = $region12
      $region11: #{tpu_custom_call.1} parent=5 // pred_region
        %s191 = ssub.s32 %s14, 1
        // Predicated region
        $region13: #{tpu_custom_call.1} parent=11 // pred_check
          %p192 = pneg %p78
        $region14: #{tpu_custom_call.1} parent=11 // pred_check_branch
          %194 = sbr.rel (%p192) target = $region16
        $region15: #{tpu_custom_call.1} parent=11 // pred_region
          %p195 = scmp.lt.s32.totalorder %s24, 0
          %s196 = scalar_select %p195, %s24, 0
          %s197 = smul.addr %s196, 4
          %s198 = scalar_lea.vmem %s1, %s197
        $region16: #{tpu_custom_call.1} parent=11 // pred_fallthru
          _
        // Predicated region
        $region17: #{tpu_custom_call.1} parent=11 // pred_check
          %p199 = pneg %p104
        $region18: #{tpu_custom_call.1} parent=11 // pred_check_branch
          %201 = sbr.rel (%p199) target = $region20
        $region19: #{tpu_custom_call.1} parent=11 // pred_region
          %p202 = scmp.lt.s32.totalorder %s24, 0
          %s203 = scalar_select %p202, %s24, 0
          %s204 = scalar_lea.vmem %s2, %s203
        $region20: #{tpu_custom_call.1} parent=11 // pred_fallthru
          _
        // Predicated region
        $region21: #{tpu_custom_call.1} parent=11 // pred_check
          %p205 = pneg %p130
        $region22: #{tpu_custom_call.1} parent=11 // pred_check_branch
          %207 = sbr.rel (%p205) target = $region24
        $region23: #{tpu_custom_call.1} parent=11 // pred_region
          %s208 = smul.u32 16, %s24
          %p209 = scmp.lt.s32.totalorder %s208, 15
          %s210 = scalar_select %p209, %s208, 15
          %s211 = smul.addr %s210, 4
          %s212 = scalar_lea.vmem %s3, %s211
          %s213 = smul.u32 16, %s24
        $region24: #{tpu_custom_call.1} parent=11 // pred_fallthru
          _
        // Predicated region
        $region25: #{tpu_custom_call.1} parent=11 // pred_check
          %p214 = pneg %p151
        $region26: #{tpu_custom_call.1} parent=11 // pred_check_branch
          %216 = sbr.rel (%p214) target = $region28
        $region27: #{tpu_custom_call.1} parent=11 // pred_region
          _
        $region28: #{tpu_custom_call.1} parent=11 // pred_fallthru
          _
      $region12: #{tpu_custom_call.1} parent=5 // pred_fallthru
        _
      %p217 = scmp.lt.s32.totalorder %s14, 2
      // Predicated region
      $region29: #{tpu_custom_call.1} parent=5 // pred_check
        %p218 = pneg %p217
      $region30: #{tpu_custom_call.1} parent=5 // pred_check_branch
        %220 = sbr.rel (%p218) target = $region32
      $region31: #{tpu_custom_call.1} parent=5 // pred_region
        // Predicated region
        $region33: #{tpu_custom_call.1} parent=31 // pred_check
          %p221 = pneg %p46
        $region34: #{tpu_custom_call.1} parent=31 // pred_check_branch
          %223 = sbr.rel (%p221) target = $region36
        $region35: #{tpu_custom_call.1} parent=31 // pred_region
          %p224 = scmp.lt.s32.totalorder %s21, 1
          %s225 = scalar_select %p224, %s21, 1
          %s226 = smul.addr %s225, 8
          %s227 = scalar_lea.vmem %s0, %s226
        $region36: #{tpu_custom_call.1} parent=31 // pred_fallthru
          _
      $region32: #{tpu_custom_call.1} parent=5 // pred_fallthru
        _
      %p228 = scmp.le.s32.totalorder 1, %s14
      %p229 = scmp.lt.s32.totalorder %s14, 3
      %p230 = pnand %p228, %p229
      %p231 = pneg %p230
      // Predicated region
      $region37: #{tpu_custom_call.1} parent=5 // pred_check
        _
      $region38: #{tpu_custom_call.1} parent=5 // pred_check_branch
        %233 = sbr.rel (%p230) target = $region40
      $region39: #{tpu_custom_call.1} parent=5 // pred_region
        %s234 = ssub.s32 %s14, 1
        %p235 = scmp.lt.s32.totalorder %s23, 1
        %s236 = scalar_select %p235, %s23, 1
        %s237 = smul.addr %s236, 8
        %s238 = scalar_lea.vmem %s0, %s237
        %p239 = pneg %p52
        %p240 = pneg %p49
        %p241 = scmp.lt.s32.totalorder %s24, 0
        %s242 = scalar_select %p241, %s24, 0
        %s243 = smul.addr %s242, 4
        %s244 = scalar_lea.vmem %s1, %s243
        %p245 = pneg %p78
        %p246 = pneg %p75
        %p247 = scmp.lt.s32.totalorder %s24, 0
        %s248 = scalar_select %p247, %s24, 0
        %s249 = scalar_lea.vmem %s2, %s248
        %p250 = pneg %p104
        %p251 = pneg %p101
        %s252 = smul.u32 16, %s24
        %p253 = scmp.lt.s32.totalorder %s252, 15
        %s254 = scalar_select %p253, %s252, 15
        %s255 = smul.addr %s254, 4
        %s256 = scalar_lea.vmem %s3, %s255
        %p257 = pneg %p130
        %p258 = pneg %p127
        %p259 = pneg %p151
        %p260 = pneg %p148
        %p261 = pneg %p177
        %p262 = pneg %p174
        %s263 = sand.u32 %s164, 1
        %s264 = scalar_lea.sflag [#allocation4], %s263
        %s265 = sand.u32 %s164, 1
        %s266 = smul.addr %s265, 8
        %s267 = scalar_lea.vmem [#allocation3], %s266
        %p268 = scmp.lt.s32.totalorder %s23, 1
        %s269 = scalar_select %p268, %s23, 1
        %s270 = smul.addr %s269, 8
        %s271 = scalar_lea.vmem %s0, %s270
        %p272 = scmp.lt.s32.totalorder %s24, 0
        %s273 = scalar_select %p272, %s24, 0
        %s274 = smul.addr %s273, 4
        %s275 = scalar_lea.vmem %s1, %s274
        %p276 = scmp.lt.s32.totalorder %s24, 0
        %s277 = scalar_select %p276, %s24, 0
        %s278 = scalar_lea.vmem %s2, %s277
        %s279 = smul.u32 16, %s24
        %p280 = scmp.lt.s32.totalorder %s279, 15
        %s281 = scalar_select %p280, %s279, 15
        %s282 = smul.addr %s281, 4
        %s283 = scalar_lea.vmem %s3, %s282
        %s284 = smul.u32 16, %s24
        %p286 = scmp.eq.s32.totalorder %s24, 0
        // Predicated region
        $region41: #{tpu_custom_call.1} parent=39 // pred_check
          %p287 = pneg %p286
        $region42: #{tpu_custom_call.1} parent=39 // pred_check_branch
          %289 = sbr.rel (%p287) target = $region44
        $region43: #{tpu_custom_call.1} parent=39 // pred_region
          %vm290 = vcmask 261120
          %291 = vst.msk [vmem:[#allocation2] sm:$0xff] %vm290, 0.0
        $region44: #{tpu_custom_call.1} parent=39 // pred_fallthru
          _
        %v292 = vld [vmem:[%s275] sm:$0xf]
        %v293 = vld [vmem:[%s275 + $0x4] sm:$0xf]
        %v294 = vld [vmem:[%s275 + $0x8] sm:$0xf]
        %v295 = vld [vmem:[%s275 + $0xc] sm:$0xf]
        %v296 = vld [vmem:[%s283] sm:$0xf]
        %v297 = vld [vmem:[%s283 + $0x4] sm:$0xf]
        %v298 = vld [vmem:[%s283 + $0x8] sm:$0xf]
        %v299 = vld [vmem:[%s283 + $0xc] sm:$0xf]
        %v300 = vld [vmem:[%s283 + $0x10] sm:$0xf]
        %v301 = vld [vmem:[%s283 + $0x14] sm:$0xf]
        %v302 = vld [vmem:[%s283 + $0x18] sm:$0xf]
        %v303 = vld [vmem:[%s283 + $0x1c] sm:$0xf]
        %v304 = vld [vmem:[%s283 + $0x20] sm:$0xf]
        %v305 = vld [vmem:[%s283 + $0x24] sm:$0xf]
        %v306 = vld [vmem:[%s283 + $0x28] sm:$0xf]
        %v307 = vld [vmem:[%s283 + $0x2c] sm:$0xf]
        %v308 = vld [vmem:[%s283 + $0x30] sm:$0xf]
        %v309 = vld [vmem:[%s283 + $0x34] sm:$0xf]
        %v310 = vld [vmem:[%s283 + $0x38] sm:$0xf]
        %v311 = vld [vmem:[%s283 + $0x3c] sm:$0xf]
        %v312 = vld [vmem:[%s271] sm:$0xff]
        %v313 = vpack.c.bf16 %v312, %v312
        %v314 = vld [vmem:[%s278] sm:$0x1]
        %v316 = vlaneseq
        %v317 = vshrl.u32 %v316, 7
        %v318 = vsub.s32 0, %v317
        %v319 = vrot.slane %v314, %v318
        %v325 = vunpack.c.l.b16 %v292
        %v326 = vunpack.c.l.b16 %v293
        %v327 = vunpack.c.l.b16 %v294
        %v328 = vunpack.c.l.b16 %v295
        %v329 = vpack.c.b16 %v326, %v325
        %v330 = vpack.c.b16 %v328, %v327
        %vm333 = vcmask 261120
        %v335 = vsel %vm333, %v313, 0
        %337 = vmatprep.subr.bf16.mxu0 0
        %338 = vmatpush1.bf16.msra.mxu0 0
        %339 = vmatprep.subr.bf16.mxu0 0
        %340 = vmatpush1.bf16.msra.mxu0 0
        %341 = vmatprep.subr.bf16.mxu0 0
        %342 = vmatpush1.bf16.msra.mxu0 0
        %343 = vmatprep.subr.bf16.mxu0 0
        %344 = vmatpush1.bf16.msra.mxu0 0
        %345 = vmatprep.subr.bf16.mxu0 0
        %346 = vmatpush1.bf16.msra.mxu0 0
        %347 = vmatprep.subr.bf16.mxu0 0
        %348 = vmatpush1.bf16.msra.mxu0 0
        %349 = vmatprep.subr.bf16.mxu0 0
        %350 = vmatpush1.bf16.msra.mxu0 %v330
        %351 = vmatprep.subr.bf16.mxu0 0
        %352 = vmatpush1.bf16.msra.mxu0 %v329
        %353 = vmatprep.subr.bf16.mxu0 0
        %354 = vmatpush2.bf16.msra.mxu0 0
        %355 = vmatprep.subr.bf16.mxu0 0
        %356 = vmatpush2.bf16.msra.mxu0 0
        %357 = vmatprep.subr.bf16.mxu0 0
        %358 = vmatpush2.bf16.msra.mxu0 0
        %359 = vmatprep.subr.bf16.mxu0 0
        %360 = vmatpush2.bf16.msra.mxu0 0
        %361 = vmatprep.subr.bf16.mxu0 0
        %362 = vmatpush2.bf16.msra.mxu0 0
        %363 = vmatprep.subr.bf16.mxu0 0
        %364 = vmatpush2.bf16.msra.mxu0 0
        %365 = vmatprep.subr.bf16.mxu0 0
        %366 = vmatpush2.bf16.msra.mxu0 0
        %367 = vmatprep.subr.bf16.mxu0 0
        %368 = vmatpush2.bf16.msra.mxu0 0
        %369 = vmatprep.mubr.bf16.mxu0 0
        %370 = vmatmul.mubr.bf16.gmra.mxu0 %v335
        %v371 = vpop.f32.mrf.mxu0
        %v372 = vadd.f32 %v319, %v371
        %v373 = vpop.f32.mrf.mxu0
        %v374 = vpop.f32.mrf.mxu0
        %v375 = vpop.f32.mrf.mxu0
        %376 = vdwg.mxu0
        %v377 = vmul.f32 %v372, 0.5
        %v378 = vmul.f32 %v372, 0.044715
        %v379 = vmul.f32 %v378, %v372
        %v380 = vmul.f32 %v379, %v372
        %v381 = vadd.f32 %v372, %v380
        %v382 = vmul.f32 %v381, 0.7978846
        %v383 = vtanh.pop %v382
        %v384 = vadd.f32 %v383, 1.0
        %v385 = vmul.f32 %v377, %v384
        %v386 = vld [vmem:[#allocation2] sm:$0xff]
        %v387 = vpack.c.bf16 %v385, %v385
        %v404 = vunpack.c.l.b16 %v296
        %v405 = vunpack.c.l.b16 %v297
        %v406 = vunpack.c.l.b16 %v298
        %v407 = vunpack.c.l.b16 %v299
        %v408 = vunpack.c.l.b16 %v300
        %v409 = vunpack.c.l.b16 %v301
        %v410 = vunpack.c.l.b16 %v302
        %v411 = vunpack.c.l.b16 %v303
        %v412 = vunpack.c.l.b16 %v304
        %v413 = vunpack.c.l.b16 %v305
        %v414 = vunpack.c.l.b16 %v306
        %v415 = vunpack.c.l.b16 %v307
        %v416 = vunpack.c.l.b16 %v308
        %v417 = vunpack.c.l.b16 %v309
        %v418 = vunpack.c.l.b16 %v310
        %v419 = vunpack.c.l.b16 %v311
        %v420 = vpack.c.b16 %v405, %v404
        %v421 = vpack.c.b16 %v407, %v406
        %v422 = vpack.c.b16 %v409, %v408
        %v423 = vpack.c.b16 %v411, %v410
        %v424 = vpack.c.b16 %v413, %v412
        %v425 = vpack.c.b16 %v415, %v414
        %v426 = vpack.c.b16 %v417, %v416
        %v427 = vpack.c.b16 %v419, %v418
        %436 = vmatprep.subr.bf16.mxu0 0
        %437 = vmatpush1.bf16.msra.mxu0 %v427
        %438 = vmatprep.subr.bf16.mxu0 0
        %439 = vmatpush1.bf16.msra.mxu0 %v426
        %440 = vmatprep.subr.bf16.mxu0 0
        %441 = vmatpush1.bf16.msra.mxu0 %v425
        %442 = vmatprep.subr.bf16.mxu0 0
        %443 = vmatpush1.bf16.msra.mxu0 %v424
        %444 = vmatprep.subr.bf16.mxu0 0
        %445 = vmatpush1.bf16.msra.mxu0 %v423
        %446 = vmatprep.subr.bf16.mxu0 0
        %447 = vmatpush1.bf16.msra.mxu0 %v422
        %448 = vmatprep.subr.bf16.mxu0 0
        %449 = vmatpush1.bf16.msra.mxu0 %v421
        %450 = vmatprep.subr.bf16.mxu0 0
        %451 = vmatpush1.bf16.msra.mxu0 %v420
        %452 = vmatprep.subr.bf16.mxu0 0
        %453 = vmatpush2.bf16.msra.mxu0 0
        %454 = vmatprep.subr.bf16.mxu0 0
        %455 = vmatpush2.bf16.msra.mxu0 0
        %456 = vmatprep.subr.bf16.mxu0 0
        %457 = vmatpush2.bf16.msra.mxu0 0
        %458 = vmatprep.subr.bf16.mxu0 0
        %459 = vmatpush2.bf16.msra.mxu0 0
        %460 = vmatprep.subr.bf16.mxu0 0
        %461 = vmatpush2.bf16.msra.mxu0 0
        %462 = vmatprep.subr.bf16.mxu0 0
        %463 = vmatpush2.bf16.msra.mxu0 0
        %464 = vmatprep.subr.bf16.mxu0 0
        %465 = vmatpush2.bf16.msra.mxu0 0
        %466 = vmatprep.subr.bf16.mxu0 0
        %467 = vmatpush2.bf16.msra.mxu0 0
        %468 = vmatprep.mubr.bf16.mxu0 0
        %469 = vmatmul.mubr.bf16.gmra.mxu0 %v387
        %v470 = vpop.f32.mrf.mxu0
        %v471 = vadd.f32 0.0, %v470
        %v472 = vpop.f32.mrf.mxu0
        %v473 = vpop.f32.mrf.mxu0
        %v474 = vpop.f32.mrf.mxu0
        %475 = vdwg.mxu0
        %v476 = vadd.f32 %v386, %v471
        %477 = vst.msk [vmem:[#allocation2] sm:$0xff] %vm333, %v476
        // Predicated region
        $region45: #{tpu_custom_call.1} parent=39 // pred_check
          %p478 = pneg %p286
        $region46: #{tpu_custom_call.1} parent=39 // pred_check_branch
          %480 = sbr.rel (%p478) target = $region48
        $region47: #{tpu_custom_call.1} parent=39 // pred_region
          %v481 = vld [vmem:[#allocation2] sm:$0xff]
          %v482 = vld [vmem:[%s4] sm:$0x1]
          %v484 = vlaneseq
          %v485 = vshrl.u32 %v484, 7
          %v486 = vsub.s32 0, %v485
          %v487 = vrot.slane %v482, %v486
          %v489 = vadd.f32 %v481, %v487
          %490 = vst.msk [vmem:[%s267] sm:$0xff] %vm333, %v489
        $region48: #{tpu_custom_call.1} parent=39 // pred_fallthru
          _
        %s491 = sand.u32 %s164, 1
        %s492 = scalar_lea.sflag [#allocation4], %s491
        %s493 = sand.u32 %s164, 1
        %s494 = smul.addr %s493, 8
        %s495 = scalar_lea.vmem [#allocation3], %s494
        // Predicated region
        $region49: #{tpu_custom_call.1} parent=39 // pred_check
          %p496 = pneg %p174
        $region50: #{tpu_custom_call.1} parent=39 // pred_check_branch
          %498 = sbr.rel (%p496) target = $region52
        $region51: #{tpu_custom_call.1} parent=39 // pred_region
          %s500 = ssub.s32 128, 128
          %501 = vsyncadd %s492, %s500
          %s502 = smul.addr %s23, 128
          %s503 = scalar_lea.hbm %s5, %s502
          %s505 = sshll.u32 %s495, 4
          %s506 = int_to_ptr.vmem [resolvable:$true] %s505
          %508 = dma.vmem_to_hbm [thread:$0]  %s506, 128, %s503, %s492
        $region52: #{tpu_custom_call.1} parent=39 // pred_fallthru
          _
      $region40: #{tpu_custom_call.1} parent=5 // pred_fallthru
        _
      %p509 = scmp.le.s32.totalorder 2, %s14
      // Predicated region
      $region53: #{tpu_custom_call.1} parent=5 // pred_check
        %p510 = pneg %p509
      $region54: #{tpu_custom_call.1} parent=5 // pred_check_branch
        %512 = sbr.rel (%p510) target = $region56
      $region55: #{tpu_custom_call.1} parent=5 // pred_region
        %s513 = ssub.s32 %s14, 2
        // Predicated region
        $region57: #{tpu_custom_call.1} parent=55 // pred_check
          %p514 = pneg %p180
        $region58: #{tpu_custom_call.1} parent=55 // pred_check_branch
          %516 = sbr.rel (%p514) target = $region60
        $region59: #{tpu_custom_call.1} parent=55 // pred_region
          %s517 = sand.u32 %s165, 1
          %s518 = scalar_lea.sflag [#allocation4], %s517
          %s519 = sand.u32 %s165, 1
          %s520 = smul.addr %s519, 8
          %s521 = scalar_lea.vmem [#allocation3], %s520
          %522 = dma.done %s518, 128
        $region60: #{tpu_custom_call.1} parent=55 // pred_fallthru
          _
      $region56: #{tpu_custom_call.1} parent=5 // pred_fallthru
        _
    $region6: #{tpu_custom_call.1} parent=1 // loop_footer
      %s18 = sadd.s32 1, %s14
    $region7: #{tpu_custom_call.1} parent=1 // loop_footer_branch
      %13 = sbr.rel target = $region3
    $region8: #{tpu_custom_call.1} parent=1 // loop_exit
      _
    %523 = vsyncpa [#allocation4], 1
    %s524 = scalar_lea.sflag [#allocation4], 1
    %525 = vsyncpa %s524, 1

</llo_original>
